<compile_context>
chip_gen: v7x
topology: tpu7x:2x2x1
jax: 0.10.0
libtpu: 0.0.40
codegen_flags: <defaults>
</compile_context>

<pallas_src>
import functools

import numpy as np
import jax
import jax.numpy as jnp
from jax import lax
from jax.experimental import pallas as pl
from jax.experimental.pallas import tpu as pltpu


def _i32(v):
    """Python int -> int with the same 32-bit pattern, as a signed int32 value."""
    return int(np.asarray(v & 0xFFFFFFFF, dtype=np.uint32).view(np.int32))


_GOLD = _i32(0x9E3779B9)
_MIX1 = _i32(0x85EBCA6B)
_MIX2 = _i32(0xC2B2AE35)


def _fmix32(x):
    """murmur3 finalizer on int32 (wrapping mul, logical shifts)."""
    x = x ^ lax.shift_right_logical(x, jnp.int32(16))
    x = x * jnp.int32(_MIX1)
    x = x ^ lax.shift_right_logical(x, jnp.int32(13))
    x = x * jnp.int32(_MIX2)
    x = x ^ lax.shift_right_logical(x, jnp.int32(16))
    return x


def _bias_residual_dropout_kernel(seed_ref, x_ref, r_ref, b_ref, o_ref, *,
                                  ratio, tm, th, w_total, compute_dtype):
    # x_ref/r_ref/o_ref: (tm, th)   b_ref: (1, th)   seed_ref: SMEM (1,) int32
    cd = compute_dtype
    x = x_ref[...].astype(cd)
    b = b_ref[...].astype(cd)
    r = r_ref[...].astype(cd)

    val = x + b  # bias add (broadcast over rows)

    # Stateless per-element dropout mask: hash of (seed, global flat index).
    # The flat index is taken in the folded [M2, W] layout, which equals the
    # original m*H + h index (row-major), so the mask is identical regardless
    # of row-folding or tiling.  (Wraps mod 2^32 for enormous tensors; fine.)
    row0 = pl.program_id(0) * tm
    col0 = pl.program_id(1) * th
    rows = lax.broadcasted_iota(jnp.int32, (tm, th), 0) + row0
    cols = lax.broadcasted_iota(jnp.int32, (tm, th), 1) + col0
    flat = rows * jnp.int32(w_total) + cols
    h = _fmix32(flat * jnp.int32(_GOLD) + seed_ref[0])
    r24 = lax.shift_right_logical(h, jnp.int32(8))      # uniform in [0, 2^24)

    thresh = int(round(float(ratio) * (1 << 24)))        # drop iff r24 < thresh
    keep = r24 >= jnp.int32(thresh)
    scale = jnp.asarray(1.0 / (1.0 - float(ratio)), dtype=cd)
    val = jnp.where(keep, val * scale, jnp.zeros_like(val))

    o_ref[...] = (val + r).astype(o_ref.dtype)


_WINDOW_BUDGET = 4 << 20  # bytes per block window (double-buffered by Pallas)


def _pick_tiles(M2, W, itemsize):
    """Pick (tm, th): prefer full-row lane-dense tiles within the VMEM budget."""
    if W % 128 == 0:
        th = W
        if 8 * W * itemsize > 2 * _WINDOW_BUDGET:
            # Extremely wide rows: split columns on a 128-aligned divisor.
            for c in (32768, 16384, 8192, 4096, 2048, 1024, 512, 256, 128):
                if W % c == 0 and 8 * c * itemsize <= _WINDOW_BUDGET:
                    th = c
                    break
    else:
        # TODO(synk): H not a multiple of 128 and not foldable -> masked
        # (lane-partial) stores; correct but not lane-dense.
        th = W
    tm = (_WINDOW_BUDGET // max(1, th * itemsize)) // 8 * 8
    tm = int(max(8, min(tm, 4096)))
    if tm >= M2:
        tm = M2  # block == full row extent: no ragged edge, exempt from 8-div rule
    return tm, th


def deepspeed_bias_residual_dropout(x, residual, bias, *, ratio=0.1,
                                    training=False, seed=0, compute_dtype=None):
    """x, residual: [..., H]; bias: [H].  Returns dropout(x + bias) + residual."""
    assert x.shape == residual.shape, "input/residual shape mismatch"
    orig_shape = x.shape
    H = orig_shape[-1]
    assert bias.shape == (H,), "bias must be [hidden]"
    assert 0.0 <= float(ratio) < 1.0, "hidden_dropout_ratio must be in [0, 1)"

    # Eval / no-dropout: a trivial fused elementwise op XLA already emits at the
    # HBM roofline — skip pallas_call entirely (no per-call / per-step overhead).
    if (not training) or float(ratio) == 0.0:
        return x + bias + residual

    M = int(np.prod(orig_shape[:-1]))

    if compute_dtype is None:
        # bf16 VALU exists on v6e/v7x; on v5e Mosaic promotes internally anyway.
        compute_dtype = x.dtype if x.dtype == jnp.bfloat16 else jnp.float32

    # Layout: flatten to [M2, W].  If H is narrower than one lane group (128),
    # fold k rows per block row (row-major reshape: zero-copy; dropout mask is
    # unchanged because the flat element index is preserved).
    if H % 128 != 0 and H < 128 and 128 % H == 0 and M % (128 // H) == 0:
        k = 128 // H
    else:
        k = 1
    M2, W = M // k, H * k
    x2d = x.reshape(M2, W)
    r2d = residual.reshape(M2, W)
    b_row = (jnp.tile(bias, k) if k > 1 else bias).reshape(1, W)

    itemsize = jnp.dtype(x.dtype).itemsize
    tm, th = _pick_tiles(M2, W, itemsize)

    # No host-side padding: ragged last row-block is masked by Pallas.
    grid = (pl.cdiv(M2, tm), W // th)

    seed_arr = jnp.asarray([_i32(int(seed))], dtype=jnp.int32)

    kernel = functools.partial(
        _bias_residual_dropout_kernel,
        ratio=float(ratio), tm=tm, th=th, w_total=W, compute_dtype=compute_dtype)

    cost = pl.CostEstimate(
        flops=4 * M2 * W,                        # bias add, scale, select, residual add
        transcendentals=0,
        bytes_accessed=(3 * M2 * W + W) * itemsize,
    )

    out2d = pl.pallas_call(
        kernel,
        out_shape=jax.ShapeDtypeStruct((M2, W), x.dtype),
        grid_spec=pltpu.PrefetchScalarGridSpec(
            num_scalar_prefetch=1,               # seed lands in SMEM
            grid=grid,
            in_specs=[
                pl.BlockSpec((tm, th), lambda i, j, s: (i, j)),   # input
                pl.BlockSpec((tm, th), lambda i, j, s: (i, j)),   # residual
                pl.BlockSpec((1, th), lambda i, j, s: (0, j)),    # bias (fetched once per column tile)
            ],
            out_specs=pl.BlockSpec((tm, th), lambda i, j, s: (i, j)),
        ),
        compiler_params=pltpu.CompilerParams(
            dimension_semantics=("parallel", "parallel"),         # megacore-friendly
            vmem_limit_bytes=48 * 1024 * 1024),
        cost_estimate=cost,
    )(seed_arr, x2d, r2d, b_row)

    return out2d.reshape(orig_shape)


# TODO(synk): backward pass (and persisting the dropout mask for it) and the
# fp16 stochastic_mode (stochastic-rounding) variant are not implemented
# (forward only).


if __name__ == "__main__":
    key = jax.random.PRNGKey(0)

    # Case 1: small config consistent with the module: batch=2, seq=8, hidden=32.
    B, S, H = 2, 8, 32
    ratio = 0.1
    kx, kr, kb, key = jax.random.split(key, 4)
    x = jax.random.normal(kx, (B, S, H), dtype=jnp.float32)
    residual = jax.random.normal(kr, (B, S, H), dtype=jnp.float32)
    bias = jax.random.normal(kb, (H,), dtype=jnp.float32)

    # Eval path (dropout disabled): exact match against reference (pure JAX path).
    out_eval = jax.block_until_ready(
        deepspeed_bias_residual_dropout(x, residual, bias, ratio=ratio, training=False))
    assert out_eval.shape == (B, S, H)
    assert jnp.allclose(out_eval, x + bias + residual, atol=1e-5, rtol=1e-5), "eval mismatch"

    # Training path (Pallas kernel, row-folded to lane width 128): every element
    # must be either dropped (-> residual) or kept-and-scaled, ~(1-ratio) kept.
    out_train = jax.block_until_ready(
        deepspeed_bias_residual_dropout(x, residual, bias, ratio=ratio,
                                        training=True, seed=1234))
    kept_val = (x + bias) / (1.0 - ratio) + residual
    is_kept = jnp.isclose(out_train, kept_val, atol=1e-4, rtol=1e-4)
    is_dropped = jnp.isclose(out_train, residual, atol=1e-4, rtol=1e-4)
    assert bool(jnp.all(is_kept | is_dropped)), "training path produced bad values"
    keep_frac = float(jnp.mean(is_kept.astype(jnp.float32)))
    assert 0.6 <= keep_frac <= 1.0, f"unexpected keep fraction {keep_frac}"

    # Case 2: lane-dense hidden (full-row tiles, no fold).
    B2, S2, H2 = 2, 8, 256
    ratio2 = 0.25
    kx, kr, kb, key = jax.random.split(key, 4)
    x2 = jax.random.normal(kx, (B2, S2, H2), dtype=jnp.float32)
    r2 = jax.random.normal(kr, (B2, S2, H2), dtype=jnp.float32)
    b2 = jax.random.normal(kb, (H2,), dtype=jnp.float32)
    out2 = jax.block_until_ready(
        deepspeed_bias_residual_dropout(x2, r2, b2, ratio=ratio2, training=True, seed=7))
    kept2 = (x2 + b2) / (1.0 - ratio2) + r2
    isk2 = jnp.isclose(out2, kept2, atol=1e-4, rtol=1e-4)
    isd2 = jnp.isclose(out2, r2, atol=1e-4, rtol=1e-4)
    assert bool(jnp.all(isk2 | isd2)), "training path (H=256) produced bad values"
    kf2 = float(jnp.mean(isk2.astype(jnp.float32)))
    assert 0.55 <= kf2 <= 0.95, f"unexpected keep fraction {kf2}"

    print("KERNEL_OK")
</pallas_src>

<mosaic_0001>
module attributes {stable_mosaic.version = 11 : i64} {
  func.func @_bias_residual_dropout_kernel(%arg0: i32, %arg1: i32, %arg2: memref<1xi32, #tpu.memory_space<smem>>, %arg3: memref<4x128xf32, #tpu.memory_space<vmem>>, %arg4: memref<4x128xf32, #tpu.memory_space<vmem>>, %arg5: memref<1x128xf32, #tpu.memory_space<vmem>>, %arg6: memref<4x128xf32, #tpu.memory_space<vmem>>) attributes {dimension_semantics = [#tpu.dimension_semantics<parallel>, #tpu.dimension_semantics<parallel>], iteration_bounds = array<i64: 1, 1>, scalar_prefetch = 1 : i64, scratch_operands = 0 : i64, tpu.core_type = #tpu.core_type<tc>, window_params = [{transform_indices = @transform_0, window_bounds = array<i64: 4, 128>}, {transform_indices = @transform_1, window_bounds = array<i64: 4, 128>}, {transform_indices = @transform_2, window_bounds = array<i64: 1, 128>}, {transform_indices = @transform_3, window_bounds = array<i64: 4, 128>}]} {
    %c0 = arith.constant 0 : index
    %c0_0 = arith.constant 0 : index
    %0 = vector.load %arg3[%c0, %c0_0] : memref<4x128xf32, #tpu.memory_space<vmem>>, vector<4x128xf32>
    %c0_1 = arith.constant 0 : index
    %c0_2 = arith.constant 0 : index
    %1 = vector.load %arg5[%c0_1, %c0_2] : memref<1x128xf32, #tpu.memory_space<vmem>>, vector<1x128xf32>
    %c0_3 = arith.constant 0 : index
    %c0_4 = arith.constant 0 : index
    %2 = vector.load %arg4[%c0_3, %c0_4] : memref<4x128xf32, #tpu.memory_space<vmem>>, vector<4x128xf32>
    %3 = vector.broadcast %1 : vector<1x128xf32> to vector<4x128xf32>
    %4 = arith.addf %0, %3 : vector<4x128xf32>
    %c4_i32 = arith.constant 4 : i32
    %5 = arith.muli %arg0, %c4_i32 : i32
    %c128_i32 = arith.constant 128 : i32
    %6 = arith.muli %arg1, %c128_i32 : i32
    %7 = tpu.iota {dimensions = array<i32: 0>} : vector<4x128xi32>
    %8 = vector.broadcast %5 : i32 to vector<4x128xi32>
    %9 = arith.addi %7, %8 : vector<4x128xi32>
    %10 = tpu.iota {dimensions = array<i32: 1>} : vector<4x128xi32>
    %11 = vector.broadcast %6 : i32 to vector<4x128xi32>
    %12 = arith.addi %10, %11 : vector<4x128xi32>
    %c128_i32_5 = arith.constant 128 : i32
    %13 = vector.broadcast %c128_i32_5 : i32 to vector<4x128xi32>
    %14 = arith.muli %9, %13 : vector<4x128xi32>
    %15 = arith.addi %14, %12 : vector<4x128xi32>
    %c-1640531527_i32 = arith.constant -1640531527 : i32
    %16 = vector.broadcast %c-1640531527_i32 : i32 to vector<4x128xi32>
    %17 = arith.muli %15, %16 : vector<4x128xi32>
    %c0_6 = arith.constant 0 : index
    %18 = memref.load %arg2[%c0_6] : memref<1xi32, #tpu.memory_space<smem>>
    %19 = vector.broadcast %18 : i32 to vector<4x128xi32>
    %20 = arith.addi %17, %19 : vector<4x128xi32>
    %c16_i32 = arith.constant 16 : i32
    %21 = vector.broadcast %c16_i32 : i32 to vector<4x128xi32>
    %22 = arith.shrui %20, %21 : vector<4x128xi32>
    %23 = arith.xori %20, %22 : vector<4x128xi32>
    %c-2048144789_i32 = arith.constant -2048144789 : i32
    %24 = vector.broadcast %c-2048144789_i32 : i32 to vector<4x128xi32>
    %25 = arith.muli %23, %24 : vector<4x128xi32>
    %c13_i32 = arith.constant 13 : i32
    %26 = vector.broadcast %c13_i32 : i32 to vector<4x128xi32>
    %27 = arith.shrui %25, %26 : vector<4x128xi32>
    %28 = arith.xori %25, %27 : vector<4x128xi32>
    %c-1028477387_i32 = arith.constant -1028477387 : i32
    %29 = vector.broadcast %c-1028477387_i32 : i32 to vector<4x128xi32>
    %30 = arith.muli %28, %29 : vector<4x128xi32>
    %c16_i32_7 = arith.constant 16 : i32
    %31 = vector.broadcast %c16_i32_7 : i32 to vector<4x128xi32>
    %32 = arith.shrui %30, %31 : vector<4x128xi32>
    %33 = arith.xori %30, %32 : vector<4x128xi32>
    %c8_i32 = arith.constant 8 : i32
    %34 = vector.broadcast %c8_i32 : i32 to vector<4x128xi32>
    %35 = arith.shrui %33, %34 : vector<4x128xi32>
    %c1677722_i32 = arith.constant 1677722 : i32
    %36 = vector.broadcast %c1677722_i32 : i32 to vector<4x128xi32>
    %37 = arith.cmpi sge, %35, %36 : vector<4x128xi32>
    %cst = arith.constant 1.11111116 : f32
    %38 = vector.broadcast %cst : f32 to vector<4x128xf32>
    %39 = arith.mulf %4, %38 : vector<4x128xf32>
    %cst_8 = arith.constant 0.000000e+00 : f32
    %40 = vector.broadcast %cst_8 : f32 to vector<4x128xf32>
    %41 = arith.select %37, %39, %40 : vector<4x128xi1>, vector<4x128xf32>
    %42 = arith.addf %41, %2 : vector<4x128xf32>
    %c0_9 = arith.constant 0 : index
    %c0_10 = arith.constant 0 : index
    %43 = vector.load %arg6[%c0_9, %c0_10] : memref<4x128xf32, #tpu.memory_space<vmem>>, vector<4x128xf32>
    tpu.vector_store %arg6[%c0_9, %c0_10], %42 {strides = array<i32>} : memref<4x128xf32, #tpu.memory_space<vmem>>, vector<4x128xf32>,
    return
  }
  func.func @transform_0(%arg0: i32, %arg1: i32, %arg2: memref<1xi32, #tpu.memory_space<smem>>) -> (i32, i32) {
    %c0_i32 = arith.constant 0 : i32
    return %arg0, %arg1 : i32, i32
  }
  func.func @transform_1(%arg0: i32, %arg1: i32, %arg2: memref<1xi32, #tpu.memory_space<smem>>) -> (i32, i32) {
    %c0_i32 = arith.constant 0 : i32
    return %arg0, %arg1 : i32, i32
  }
  func.func @transform_2(%arg0: i32, %arg1: i32, %arg2: memref<1xi32, #tpu.memory_space<smem>>) -> (i32, i32) {
    %c0_i32 = arith.constant 0 : i32
    %c0_i32_0 = arith.constant 0 : i32
    return %c0_i32, %arg1 : i32, i32
  }
  func.func @transform_3(%arg0: i32, %arg1: i32, %arg2: memref<1xi32, #tpu.memory_space<smem>>) -> (i32, i32) {
    %c0_i32 = arith.constant 0 : i32
    return %arg0, %arg1 : i32, i32
  }
}

</mosaic_0001>

<llo_original>
// kernel: tpu_custom_call.1
$region0: #{tpu_custom_call.1}
  #allocation0 [shape = 'u32[]', space=smem, size = 0x4, offset = 0x4, fixed_abs, tag = 'smem constant byte address 0x4 - core index']
  #allocation1 [shape = 'u32[144,128]{1,0:T(1,128)}', space=vmem, size = 0x12000, scoped, tag = 'internal scratch']
  #allocation2 [shape = 's32[1]{0}', space=sflag, size = 0x4, scoped, tag = 'scoped memory for tpu_custom_call.1']
  #allocation3 [shape = 's32[1]{0:T(128)S(6)}', space=smem, size = 0x200, scoped, tag = 'prefetched SMEM operand 0']
  %s0 = inlined_call_operand.<no memory space> [shape: s32[1], index: 0, kind: input, shape index: {}]
  %s1 = inlined_call_operand.hbm [shape: f32[4,128], index: 1, kind: input, shape index: {}]
  %s2 = inlined_call_operand.vmem [shape: f32[4,128], index: 2, kind: input, shape index: {}]
  %s3 = inlined_call_operand.vmem [shape: f32[1,128], index: 3, kind: input, shape index: {}]
  %s4 = inlined_call_operand.hbm [shape: f32[4,128], index: 4, kind: output, shape index: {}]
  %s5 = sld [smem:[#allocation0]]
  $region26: #{tpu_custom_call.1} parent=0
    _
  %s7 = ssub.s32 1, %s5
  %s8 = scalar_select 0, %s7, %s5
  %9 = sst [smem:[#allocation3]] %s0
  $region1: #{tpu_custom_call.1} parent=0
    #allocation4 [shape = 'u8[2048]{0}', space=vmem, size = 0x800, scoped, tag = 'input window, operand 1, single buffered']
    #allocation5 [shape = 's32[1]{0}', space=sflag, size = 0x4, scoped, tag = 'scoped memory for tpu_custom_call.1']
    #allocation6 [shape = 's32[1]{0}', space=sflag, size = 0x4, scoped, tag = 'scoped memory for tpu_custom_call.1']
    #allocation7 [shape = 'u8[2048]{0}', space=vmem, size = 0x800, scoped, tag = 'output window, operand 0, single buffered']
    %10 = vsyncpa [#allocation5], 0
    %11 = vsyncpa [#allocation6], 0
    // Predicated region
    $region2: #{tpu_custom_call.1} parent=1 // pred_check
      _
    $region3: #{tpu_custom_call.1} parent=1 // pred_check_branch
      %13 = sbr.rel (0) target = $region5
    $region4: #{tpu_custom_call.1} parent=1 // pred_region
      %s15 = ssub.s32 64, 64
      %16 = vsyncadd [#allocation5], %s15
      %s18 = sshll.u32 [#allocation4], 4
      %s19 = int_to_ptr.vmem [resolvable:$true] %s18
      %21 = dma.hbm_to_vmem [thread:$0]  %s1, 64, %s19, [#allocation5]
    $region5: #{tpu_custom_call.1} parent=1 // pred_fallthru
      _
    // Predicated region
    $region6: #{tpu_custom_call.1} parent=1 // pred_check
      _
    $region7: #{tpu_custom_call.1} parent=1 // pred_check_branch
      %23 = sbr.rel (0) target = $region9
    $region8: #{tpu_custom_call.1} parent=1 // pred_region
      _
    $region9: #{tpu_custom_call.1} parent=1 // pred_fallthru
      _
    // Predicated region
    $region10: #{tpu_custom_call.1} parent=1 // pred_check
      _
    $region11: #{tpu_custom_call.1} parent=1 // pred_check_branch
      %25 = sbr.rel (0) target = $region13
    $region12: #{tpu_custom_call.1} parent=1 // pred_region
      _
    $region13: #{tpu_custom_call.1} parent=1 // pred_fallthru
      _
    // Predicated region
    $region14: #{tpu_custom_call.1} parent=1 // pred_check
      _
    $region15: #{tpu_custom_call.1} parent=1 // pred_check_branch
      %27 = sbr.rel (0) target = $region17
    $region16: #{tpu_custom_call.1} parent=1 // pred_region
      %28 = dma.done [#allocation5], 64
    $region17: #{tpu_custom_call.1} parent=1 // pred_fallthru
      _
    %v29 = vld [vmem:[#allocation4] sm:$0xf]
    %v30 = vld [vmem:[%s3] sm:$0x1]
    %v31 = vld [vmem:[%s2] sm:$0xf]
    %v33 = vlaneseq
    %v34 = vshrl.u32 %v33, 7
    %v35 = vsub.s32 0, %v34
    %v36 = vrot.slane %v30, %v35
    %v38 = vadd.f32 %v29, %v36
    %s39 = smul.u32 0, 4
    %s40 = smul.u32 0, 128
    %v41 = vlaneseq
    %v42 = vshrl.u32 %v41, 7
    %v43 = vstv %s39
    %v44 = vadd.s32 %v42, %v43
    %v45 = vlaneseq
    %v46 = vand.u32 %v45, 127
    %v47 = vstv %s40
    %v48 = vadd.s32 %v46, %v47
    %v49 = vmul.u32 %v44, 128
    %v50 = vadd.s32 %v49, %v48
    %v51 = vmul.u32 %v50, 2654435769
    %s52 = sld [smem:[#allocation3]]
    %v53 = vstv %s52
    %v54 = vadd.s32 %v51, %v53
    %v55 = vshrl.u32 %v54, 16
    %v56 = vxor.u32 %v54, %v55
    %v57 = vmul.u32 %v56, 2246822507
    %v58 = vshrl.u32 %v57, 13
    %v59 = vxor.u32 %v57, %v58
    %v60 = vmul.u32 %v59, 3266489909
    %v61 = vshrl.u32 %v60, 16
    %v62 = vxor.u32 %v60, %v61
    %v63 = vshrl.u32 %v62, 8
    %vm64 = vcmp.ge.s32.totalorder %v63, 1677722
    %v65 = vmul.f32 %v38, 1.1111112
    %v66 = vsel %vm64, %v65, 0.0
    %v67 = vadd.f32 %v66, %v31
    %68 = vst [vmem:[#allocation7] sm:$0xf] %v67
    // Predicated region
    $region18: #{tpu_custom_call.1} parent=1 // pred_check
      _
    $region19: #{tpu_custom_call.1} parent=1 // pred_check_branch
      %70 = sbr.rel (0) target = $region21
    $region20: #{tpu_custom_call.1} parent=1 // pred_region
      %s72 = ssub.s32 64, 64
      %73 = vsyncadd [#allocation6], %s72
      %s75 = sshll.u32 [#allocation7], 4
      %s76 = int_to_ptr.vmem [resolvable:$true] %s75
      %78 = dma.vmem_to_hbm [thread:$0]  %s76, 64, %s4, [#allocation6]
    $region21: #{tpu_custom_call.1} parent=1 // pred_fallthru
      _
    // Predicated region
    $region22: #{tpu_custom_call.1} parent=1 // pred_check
      _
    $region23: #{tpu_custom_call.1} parent=1 // pred_check_branch
      %80 = sbr.rel (0) target = $region25
    $region24: #{tpu_custom_call.1} parent=1 // pred_region
      %81 = dma.done [#allocation6], 64
    $region25: #{tpu_custom_call.1} parent=1 // pred_fallthru
      _
    %82 = vsyncpa [#allocation5], 1
    %83 = vsyncpa [#allocation6], 1

</llo_original>
